<compile_context>
chip_gen: v5e
topology: v5e:2x2
jax: 0.10.0
libtpu: 0.0.40
codegen_flags: <defaults>
</compile_context>

<pallas_src>
import functools
import math

import jax
import jax.numpy as jnp
from jax import lax
from jax.experimental import pallas as pl
from jax.experimental.pallas import tpu as pltpu


def _round_up(n, m):
    return (n + m - 1) // m * m


# ---------------------------------------------------------------------------
# Fused kernel factory (all sizes / packed-constant offsets are static)
# ---------------------------------------------------------------------------
def _make_kernel(*, bt, C1, C2, C3, L1, L3, n_cls,
                 w2_off, w3_off, fw_off, b1_row, b2_row, b3_row, fb_row):
    K = 3
    dec = L1 // L3            # stage-2 * stage-3 strides folded together (=4)

    def kernel(xcol_ref, w1_ref, pk_ref, o_ref, fc_ref):
        f32 = jnp.float32

        def wslice(off, rows, cols):
            # static slice out of the packed small-constant operand
            return pk_ref[off:off + rows, 0:cols]

        # ---------------- stage 1: one bf16 MXU matmul over the wrapper im2col ----
        h1 = jnp.dot(xcol_ref[...], w1_ref[...], preferred_element_type=f32)
        h1 = jnp.maximum(h1 + wslice(b1_row, 1, C1), 0.0)          # (bt*L1, C1)

        # per-row position p inside its batch segment (rows are b*L1 + p)
        pos = lax.broadcasted_iota(jnp.int32, (bt * L1, 1), 0) % L1

        def shifted(x, delta):
            # result[r] = x[r + delta], zero where r+delta leaves the batch segment
            n, c = x.shape
            if delta > 0:
                sh = jnp.concatenate(
                    [x[delta:, :], jnp.zeros((delta, c), x.dtype)], axis=0)
                return jnp.where(pos <= L1 - 1 - delta, sh, 0.0)
            d = -delta
            sh = jnp.concatenate(
                [jnp.zeros((d, c), x.dtype), x[:n - d, :]], axis=0)
            return jnp.where(pos >= d, sh, 0.0)

        # ---------------- stage 2 (stride 2) at full resolution -------------------
        col2 = jnp.concatenate([shifted(h1, -1), h1, shifted(h1, 1)], axis=1)
        g2 = jnp.dot(col2, wslice(w2_off, K * C1, C2), preferred_element_type=f32)
        g2 = jnp.maximum(g2 + wslice(b2_row, 1, C2), 0.0)          # (bt*L1, C2)

        # ---------------- stage 3: its stride folded in as dilation 2 -------------
        col3 = jnp.concatenate([shifted(g2, -2), g2, shifted(g2, 2)], axis=1)
        g3 = jnp.dot(col3, wslice(w3_off, K * C2, C3), preferred_element_type=f32)
        g3 = jnp.maximum(g3 + wslice(b3_row, 1, C3), 0.0)          # (bt*L1, C3)

        # ---------------- FC + softmax ---------------------------------------------
        # Valid conv-3 outputs live at rows b*L1 + dec*l; scatter them into a
        # lane-dense (bt, L3*C3) block (fc weight is pre-permuted in the wrapper
        # to reproduce torch's channel-major flatten).
        for b in range(bt):
            for l in range(L3):
                r = b * L1 + dec * l
                fc_ref[b:b + 1, l * C3:(l + 1) * C3] = g3[r:r + 1, :]

        logits = jnp.dot(fc_ref[...], wslice(fw_off, L3 * C3, n_cls),
                         preferred_element_type=f32)
        logits = logits + wslice(fb_row, 1, n_cls)

        m = jnp.max(logits, axis=-1, keepdims=True)
        e = jnp.exp(logits - m)
        o_ref[...] = (e / jnp.sum(e, axis=-1, keepdims=True)).astype(o_ref.dtype)

    return kernel


# ---------------------------------------------------------------------------
# Wrapper: im2col for stage 1, constant packing, one pallas_call
# ---------------------------------------------------------------------------
def model_forward(params, x, lengths=None, batch_tile=None):
    """Pallas equivalent of ModelConvolutional.forward(x, len); `lengths` unused,
    exactly as in the PyTorch module."""
    del lengths
    B, C0, L0 = x.shape
    K, S, P = 3, 2, 1

    def n_out(n):
        return (n + 2 * P - K) // S + 1

    L1, L2, L3 = n_out(L0), n_out(n_out(L0)), n_out(n_out(n_out(L0)))
    C1 = params["w1"].shape[0]
    C2 = params["w2"].shape[0]
    C3 = params["w3"].shape[0]
    n_cls, fc_in = params["fw"].shape
    assert fc_in == C3 * L3, "input length inconsistent with fc.in_features"
    assert L1 == 2 * L2 and L2 == 2 * L3, "strides folded onto one full-res grid"

    bt = B if batch_tile is None else batch_tile
    assert B % bt == 0

    # --- stage-1 im2col (only stage with real FLOPs), cast to bf16 for the MXU ---
    xp = jnp.pad(x, ((0, 0), (0, 0), (P, P)))                 # (B, C0, L0+2)
    taps = [xp[:, :, k:k + S * L1:S] for k in range(K)]       # each (B, C0, L1)
    xcol = jnp.stack(taps, axis=0).transpose(1, 3, 0, 2)      # (B, L1, K, C0)
    xcol = xcol.reshape(B * L1, K * C0).astype(jnp.bfloat16)  # [b*L1+l, k*C0+c]

    w1c = jnp.transpose(params["w1"], (2, 1, 0)).reshape(K * C0, C1)
    w1c = w1c.astype(jnp.bfloat16)                            # [k*C0+c, cout]

    # --- pack every small f32 constant into ONE operand --------------------------
    w2c = jnp.transpose(params["w2"], (2, 1, 0)).reshape(K * C1, C2)
    w3c = jnp.transpose(params["w3"], (2, 1, 0)).reshape(K * C2, C3)
    # fwc[l*C3 + c, o] = fw[o, c*L3 + l]  (torch channel-major flatten)
    fwc = jnp.transpose(params["fw"].reshape(n_cls, C3, L3), (2, 1, 0))
    fwc = fwc.reshape(L3 * C3, n_cls)

    w2_off = 0
    w3_off = _round_up(w2_off + K * C1, 8)
    fw_off = _round_up(w3_off + K * C2, 8)
    b1_row = fw_off + L3 * C3
    b2_row, b3_row, fb_row = b1_row + 1, b1_row + 2, b1_row + 3
    pack_rows = _round_up(fb_row + 1, 8)
    pack_cols = max(8, C1, C2, C3, n_cls)

    pack = jnp.zeros((pack_rows, pack_cols), jnp.float32)
    pack = pack.at[w2_off:w2_off + K * C1, :C2].set(w2c)
    pack = pack.at[w3_off:w3_off + K * C2, :C3].set(w3c)
    pack = pack.at[fw_off:fw_off + L3 * C3, :n_cls].set(fwc)
    pack = pack.at[b1_row, :C1].set(params["b1"])
    pack = pack.at[b2_row, :C2].set(params["b2"])
    pack = pack.at[b3_row, :C3].set(params["b3"])
    pack = pack.at[fb_row, :n_cls].set(params["fb"])

    kernel = _make_kernel(bt=bt, C1=C1, C2=C2, C3=C3, L1=L1, L3=L3, n_cls=n_cls,
                          w2_off=w2_off, w3_off=w3_off, fw_off=fw_off,
                          b1_row=b1_row, b2_row=b2_row, b3_row=b3_row,
                          fb_row=fb_row)

    return pl.pallas_call(
        kernel,
        out_shape=jax.ShapeDtypeStruct((B, n_cls), jnp.float32),
        grid=(B // bt,),
        in_specs=[
            pl.BlockSpec((bt * L1, K * C0), lambda i: (i, 0)),   # im2col rows
            pl.BlockSpec((K * C0, C1), lambda i: (0, 0)),        # conv1 weight
            pl.BlockSpec((pack_rows, pack_cols), lambda i: (0, 0)),  # packed consts
        ],
        out_specs=pl.BlockSpec((bt, n_cls), lambda i: (i, 0)),
        scratch_shapes=[pltpu.VMEM((bt, L3 * C3), jnp.float32)],
        compiler_params=pltpu.CompilerParams(
            dimension_semantics=("parallel",)),
    )(xcol, w1c, pack)


# ---------------------------------------------------------------------------
# Deterministic parameter init (PyTorch-style uniform(-1/sqrt(fan_in), +))
# ---------------------------------------------------------------------------
def init_params(key):
    def uni(k, shape, fan_in):
        bound = 1.0 / math.sqrt(fan_in)
        return jax.random.uniform(k, shape, jnp.float32, -bound, bound)

    ks = jax.random.split(key, 8)
    return {
        "w1": uni(ks[0], (2, 240, 3), 240 * 3),
        "b1": uni(ks[1], (2,), 240 * 3),
        "w2": uni(ks[2], (4, 2, 3), 2 * 3),
        "b2": uni(ks[3], (4,), 2 * 3),
        "w3": uni(ks[4], (8, 4, 3), 4 * 3),
        "b3": uni(ks[5], (8,), 4 * 3),
        "fw": uni(ks[6], (4, 48), 48),
        "fb": uni(ks[7], (4,), 48),
    }


# ---------------------------------------------------------------------------
# Pure-JAX reference (correctness check)
# ---------------------------------------------------------------------------
def reference_forward(params, x):
    def conv1d(x, w, b):
        y = lax.conv_general_dilated(x, w, window_strides=(2,), padding=[(1, 1)],
                                     dimension_numbers=("NCH", "OIH", "NCH"))
        return y + b[None, :, None]

    y = jax.nn.relu(conv1d(x, params["w1"], params["b1"]))
    y = jax.nn.relu(conv1d(y, params["w2"], params["b2"]))
    y = jax.nn.relu(conv1d(y, params["w3"], params["b3"]))
    logits = y.reshape(x.shape[0], -1) @ params["fw"].T + params["fb"]
    return jax.nn.softmax(logits, axis=-1)


if __name__ == "__main__":
    key = jax.random.PRNGKey(0)
    kp, kx = jax.random.split(key)
    params = init_params(kp)

    # Input length L=48 -> 24 -> 12 -> 6; 8*6 == fc.in_features (module-mandated).
    B, C_IN, L = 2, 240, 48
    x = jax.random.normal(kx, (B, C_IN, L), jnp.float32)
    lengths = jnp.full((B,), L, jnp.int32)  # unused, kept for signature parity

    fwd = jax.jit(functools.partial(model_forward, params))
    out = jax.block_until_ready(fwd(x, lengths))

    ref = reference_forward(params, x)
    assert out.shape == (B, 4), out.shape
    # Exact softmax divide -> rows sum to 1; bf16 stage-1 inputs (f32 accumulation)
    # keep the output within a few 1e-4 of the f32 reference.
    assert jnp.allclose(jnp.sum(out, axis=-1), 1.0, atol=1e-5)
    assert jnp.allclose(out, ref, atol=5e-3, rtol=5e-3), (out, ref)

    print("KERNEL_OK")
</pallas_src>

<mosaic_0001>
module attributes {stable_mosaic.version = 11 : i64} {
  func.func @kernel(%arg0: i32, %arg1: memref<48x720xbf16, #tpu.memory_space<vmem>>, %arg2: memref<720x2xbf16, #tpu.memory_space<vmem>>, %arg3: memref<80x8xf32, #tpu.memory_space<vmem>>, %arg4: memref<2x4xf32, #tpu.memory_space<vmem>>, %arg5: memref<2x48xf32, #tpu.memory_space<vmem>>) attributes {dimension_semantics = [#tpu.dimension_semantics<parallel>], iteration_bounds = array<i64: 1>, scalar_prefetch = 0 : i64, scratch_operands = 1 : i64, tpu.core_type = #tpu.core_type<tc>, window_params = [{transform_indices = @transform_0, window_bounds = array<i64: 48, 720>}, {pipeline_mode = #tpu.pipeline_mode<synchronous>, transform_indices = @transform_1, window_bounds = array<i64: 720, 2>}, {pipeline_mode = #tpu.pipeline_mode<synchronous>, transform_indices = @transform_2, window_bounds = array<i64: 80, 8>}, {transform_indices = @transform_3, window_bounds = array<i64: 2, 4>}]} {
    %c0 = arith.constant 0 : index
    %c0_0 = arith.constant 0 : index
    %0 = vector.load %arg1[%c0, %c0_0] : memref<48x720xbf16, #tpu.memory_space<vmem>>, vector<48x720xbf16>
    %c0_1 = arith.constant 0 : index
    %c0_2 = arith.constant 0 : index
    %1 = vector.load %arg2[%c0_1, %c0_2] : memref<720x2xbf16, #tpu.memory_space<vmem>>, vector<720x2xbf16>
    %cst = arith.constant dense<0.000000e+00> : vector<48x2xf32>
    %2 = tpu.matmul %0, %1, %cst {dimension_numbers = #tpu.dot_dimension_numbers<[1], [0], [0], [1], [0, 0, 1, 1], [], []>} : vector<48x720xbf16>, vector<720x2xbf16>, vector<48x2xf32> -> vector<48x2xf32>
    %c72 = arith.constant 72 : index
    %c0_3 = arith.constant 0 : index
    %3 = vector.load %arg3[%c72, %c0_3] : memref<80x8xf32, #tpu.memory_space<vmem>>, vector<1x2xf32>
    %4 = vector.broadcast %3 : vector<1x2xf32> to vector<48x2xf32>
    %5 = arith.addf %2, %4 : vector<48x2xf32>
    %cst_4 = arith.constant 0.000000e+00 : f32
    %6 = vector.broadcast %cst_4 : f32 to vector<48x2xf32>
    %7 = arith.maximumf %5, %6 : vector<48x2xf32>
    %8 = tpu.iota {dimensions = array<i32: 0>} : vector<48x1xi32>
    %c24_i32 = arith.constant 24 : i32
    %c0_i32 = arith.constant 0 : i32
    %9 = arith.cmpi eq, %c24_i32, %c0_i32 : i32
    %c1_i32 = arith.constant 1 : i32
    %10 = arith.select %9, %c1_i32, %c24_i32 : i32
    %11 = vector.broadcast %10 : i32 to vector<48x1xi32>
    %12 = arith.remsi %8, %11 : vector<48x1xi32>
    %c0_i32_5 = arith.constant 0 : i32
    %13 = vector.broadcast %c0_i32_5 : i32 to vector<48x1xi32>
    %14 = arith.cmpi ne, %12, %13 : vector<48x1xi32>
    %c0_i32_6 = arith.constant 0 : i32
    %15 = vector.broadcast %c0_i32_6 : i32 to vector<48x1xi32>
    %16 = arith.cmpi slt, %12, %15 : vector<48x1xi32>
    %c0_i32_7 = arith.constant 0 : i32
    %17 = arith.cmpi slt, %10, %c0_i32_7 : i32
    %18 = vector.broadcast %17 : i1 to vector<48x1xi1>
    %19 = vector.broadcast %18 : vector<48x1xi1> to vector<48x1xi1>
    %20 = arith.xori %16, %19 : vector<48x1xi1>
    %21 = arith.andi %20, %14 : vector<48x1xi1>
    %22 = vector.broadcast %10 : i32 to vector<48x1xi32>
    %23 = arith.addi %12, %22 : vector<48x1xi32>
    %24 = arith.select %21, %23, %12 : vector<48x1xi1>, vector<48x1xi32>
    %cst_8 = arith.constant 0.000000e+00 : f32
    %25 = vector.broadcast %cst_8 : f32 to vector<1x2xf32>
    %26 = vector.extract_strided_slice %7 {offsets = [0, 0], sizes = [47, 2], strides = [1, 1]} : vector<48x2xf32> to vector<47x2xf32>
    %27 = tpu.concatenate %25, %26 in 0 : vector<1x2xf32>, vector<47x2xf32> -> vector<48x2xf32>
    %c1_i32_9 = arith.constant 1 : i32
    %28 = vector.broadcast %c1_i32_9 : i32 to vector<48x1xi32>
    %29 = arith.cmpi sge, %24, %28 : vector<48x1xi32>
    %cst_10 = arith.constant 0.000000e+00 : f32
    %30 = vector.shape_cast %29 : vector<48x1xi1> to vector<48x1xi1>
    %31 = vector.broadcast %30 : vector<48x1xi1> to vector<48x2xi1>
    %32 = vector.broadcast %cst_10 : f32 to vector<48x2xf32>
    %33 = arith.select %31, %27, %32 : vector<48x2xi1>, vector<48x2xf32>
    %34 = vector.extract_strided_slice %7 {offsets = [1, 0], sizes = [47, 2], strides = [1, 1]} : vector<48x2xf32> to vector<47x2xf32>
    %cst_11 = arith.constant 0.000000e+00 : f32
    %35 = vector.broadcast %cst_11 : f32 to vector<1x2xf32>
    %36 = tpu.concatenate %34, %35 in 0 : vector<47x2xf32>, vector<1x2xf32> -> vector<48x2xf32>
    %c22_i32 = arith.constant 22 : i32
    %37 = vector.broadcast %c22_i32 : i32 to vector<48x1xi32>
    %38 = arith.cmpi sle, %24, %37 : vector<48x1xi32>
    %cst_12 = arith.constant 0.000000e+00 : f32
    %39 = vector.shape_cast %38 : vector<48x1xi1> to vector<48x1xi1>
    %40 = vector.broadcast %39 : vector<48x1xi1> to vector<48x2xi1>
    %41 = vector.broadcast %cst_12 : f32 to vector<48x2xf32>
    %42 = arith.select %40, %36, %41 : vector<48x2xi1>, vector<48x2xf32>
    %43 = tpu.concatenate %33, %7, %42 in 1 : vector<48x2xf32>, vector<48x2xf32>, vector<48x2xf32> -> vector<48x6xf32>
    %c0_13 = arith.constant 0 : index
    %c0_14 = arith.constant 0 : index
    %44 = vector.load %arg3[%c0_13, %c0_14] : memref<80x8xf32, #tpu.memory_space<vmem>>, vector<6x4xf32>
    %cst_15 = arith.constant dense<0.000000e+00> : vector<48x4xf32>
    %45 = tpu.matmul %43, %44, %cst_15 {dimension_numbers = #tpu.dot_dimension_numbers<[1], [0], [0], [1], [0, 0, 1, 1], [], []>} : vector<48x6xf32>, vector<6x4xf32>, vector<48x4xf32> -> vector<48x4xf32>
    %c73 = arith.constant 73 : index
    %c0_16 = arith.constant 0 : index
    %46 = vector.load %arg3[%c73, %c0_16] : memref<80x8xf32, #tpu.memory_space<vmem>>, vector<1x4xf32>
    %47 = vector.broadcast %46 : vector<1x4xf32> to vector<48x4xf32>
    %48 = arith.addf %45, %47 : vector<48x4xf32>
    %cst_17 = arith.constant 0.000000e+00 : f32
    %49 = vector.broadcast %cst_17 : f32 to vector<48x4xf32>
    %50 = arith.maximumf %48, %49 : vector<48x4xf32>
    %cst_18 = arith.constant 0.000000e+00 : f32
    %51 = vector.broadcast %cst_18 : f32 to vector<2x4xf32>
    %52 = vector.extract_strided_slice %50 {offsets = [0, 0], sizes = [46, 4], strides = [1, 1]} : vector<48x4xf32> to vector<46x4xf32>
    %53 = tpu.concatenate %51, %52 in 0 : vector<2x4xf32>, vector<46x4xf32> -> vector<48x4xf32>
    %c2_i32 = arith.constant 2 : i32
    %54 = vector.broadcast %c2_i32 : i32 to vector<48x1xi32>
    %55 = arith.cmpi sge, %24, %54 : vector<48x1xi32>
    %cst_19 = arith.constant 0.000000e+00 : f32
    %56 = vector.shape_cast %55 : vector<48x1xi1> to vector<48x1xi1>
    %57 = vector.broadcast %56 : vector<48x1xi1> to vector<48x4xi1>
    %58 = vector.broadcast %cst_19 : f32 to vector<48x4xf32>
    %59 = arith.select %57, %53, %58 : vector<48x4xi1>, vector<48x4xf32>
    %60 = vector.extract_strided_slice %50 {offsets = [2, 0], sizes = [46, 4], strides = [1, 1]} : vector<48x4xf32> to vector<46x4xf32>
    %cst_20 = arith.constant 0.000000e+00 : f32
    %61 = vector.broadcast %cst_20 : f32 to vector<2x4xf32>
    %62 = tpu.concatenate %60, %61 in 0 : vector<46x4xf32>, vector<2x4xf32> -> vector<48x4xf32>
    %c21_i32 = arith.constant 21 : i32
    %63 = vector.broadcast %c21_i32 : i32 to vector<48x1xi32>
    %64 = arith.cmpi sle, %24, %63 : vector<48x1xi32>
    %cst_21 = arith.constant 0.000000e+00 : f32
    %65 = vector.shape_cast %64 : vector<48x1xi1> to vector<48x1xi1>
    %66 = vector.broadcast %65 : vector<48x1xi1> to vector<48x4xi1>
    %67 = vector.broadcast %cst_21 : f32 to vector<48x4xf32>
    %68 = arith.select %66, %62, %67 : vector<48x4xi1>, vector<48x4xf32>
    %69 = tpu.concatenate %59, %50, %68 in 1 : vector<48x4xf32>, vector<48x4xf32>, vector<48x4xf32> -> vector<48x12xf32>
    %c8 = arith.constant 8 : index
    %c0_22 = arith.constant 0 : index
    %70 = vector.load %arg3[%c8, %c0_22] : memref<80x8xf32, #tpu.memory_space<vmem>>, vector<12x8xf32>
    %cst_23 = arith.constant dense<0.000000e+00> : vector<48x8xf32>
    %71 = tpu.matmul %69, %70, %cst_23 {dimension_numbers = #tpu.dot_dimension_numbers<[1], [0], [0], [1], [0, 0, 1, 1], [], []>} : vector<48x12xf32>, vector<12x8xf32>, vector<48x8xf32> -> vector<48x8xf32>
    %c74 = arith.constant 74 : index
    %c0_24 = arith.constant 0 : index
    %72 = vector.load %arg3[%c74, %c0_24] : memref<80x8xf32, #tpu.memory_space<vmem>>, vector<1x8xf32>
    %73 = vector.broadcast %72 : vector<1x8xf32> to vector<48x8xf32>
    %74 = arith.addf %71, %73 : vector<48x8xf32>
    %cst_25 = arith.constant 0.000000e+00 : f32
    %75 = vector.broadcast %cst_25 : f32 to vector<48x8xf32>
    %76 = arith.maximumf %74, %75 : vector<48x8xf32>
    %77 = vector.extract_strided_slice %76 {offsets = [0, 0], sizes = [1, 8], strides = [1, 1]} : vector<48x8xf32> to vector<1x8xf32>
    %c0_26 = arith.constant 0 : index
    %c0_27 = arith.constant 0 : index
    %78 = vector.load %arg5[%c0_26, %c0_27] : memref<2x48xf32, #tpu.memory_space<vmem>>, vector<1x8xf32>
    tpu.vector_store %arg5[%c0_26, %c0_27], %77 {strides = array<i32>} : memref<2x48xf32, #tpu.memory_space<vmem>>, vector<1x8xf32>,
    %79 = vector.extract_strided_slice %76 {offsets = [4, 0], sizes = [1, 8], strides = [1, 1]} : vector<48x8xf32> to vector<1x8xf32>
    %c0_28 = arith.constant 0 : index
    %c8_29 = arith.constant 8 : index
    %80 = vector.load %arg5[%c0_28, %c8_29] : memref<2x48xf32, #tpu.memory_space<vmem>>, vector<1x8xf32>
    tpu.vector_store %arg5[%c0_28, %c8_29], %79 {strides = array<i32>} : memref<2x48xf32, #tpu.memory_space<vmem>>, vector<1x8xf32>,
    %81 = vector.extract_strided_slice %76 {offsets = [8, 0], sizes = [1, 8], strides = [1, 1]} : vector<48x8xf32> to vector<1x8xf32>
    %c0_30 = arith.constant 0 : index
    %c16 = arith.constant 16 : index
    %82 = vector.load %arg5[%c0_30, %c16] : memref<2x48xf32, #tpu.memory_space<vmem>>, vector<1x8xf32>
    tpu.vector_store %arg5[%c0_30, %c16], %81 {strides = array<i32>} : memref<2x48xf32, #tpu.memory_space<vmem>>, vector<1x8xf32>,
    %83 = vector.extract_strided_slice %76 {offsets = [12, 0], sizes = [1, 8], strides = [1, 1]} : vector<48x8xf32> to vector<1x8xf32>
    %c0_31 = arith.constant 0 : index
    %c24 = arith.constant 24 : index
    %84 = vector.load %arg5[%c0_31, %c24] : memref<2x48xf32, #tpu.memory_space<vmem>>, vector<1x8xf32>
    tpu.vector_store %arg5[%c0_31, %c24], %83 {strides = array<i32>} : memref<2x48xf32, #tpu.memory_space<vmem>>, vector<1x8xf32>,
    %85 = vector.extract_strided_slice %76 {offsets = [16, 0], sizes = [1, 8], strides = [1, 1]} : vector<48x8xf32> to vector<1x8xf32>
    %c0_32 = arith.constant 0 : index
    %c32 = arith.constant 32 : index
    %86 = vector.load %arg5[%c0_32, %c32] : memref<2x48xf32, #tpu.memory_space<vmem>>, vector<1x8xf32>
    tpu.vector_store %arg5[%c0_32, %c32], %85 {strides = array<i32>} : memref<2x48xf32, #tpu.memory_space<vmem>>, vector<1x8xf32>,
    %87 = vector.extract_strided_slice %76 {offsets = [20, 0], sizes = [1, 8], strides = [1, 1]} : vector<48x8xf32> to vector<1x8xf32>
    %c0_33 = arith.constant 0 : index
    %c40 = arith.constant 40 : index
    %88 = vector.load %arg5[%c0_33, %c40] : memref<2x48xf32, #tpu.memory_space<vmem>>, vector<1x8xf32>
    tpu.vector_store %arg5[%c0_33, %c40], %87 {strides = array<i32>} : memref<2x48xf32, #tpu.memory_space<vmem>>, vector<1x8xf32>,
    %89 = vector.extract_strided_slice %76 {offsets = [24, 0], sizes = [1, 8], strides = [1, 1]} : vector<48x8xf32> to vector<1x8xf32>
    %c1 = arith.constant 1 : index
    %c0_34 = arith.constant 0 : index
    %90 = vector.load %arg5[%c1, %c0_34] : memref<2x48xf32, #tpu.memory_space<vmem>>, vector<1x8xf32>
    tpu.vector_store %arg5[%c1, %c0_34], %89 {strides = array<i32>} : memref<2x48xf32, #tpu.memory_space<vmem>>, vector<1x8xf32>,
    %91 = vector.extract_strided_slice %76 {offsets = [28, 0], sizes = [1, 8], strides = [1, 1]} : vector<48x8xf32> to vector<1x8xf32>
    %c1_35 = arith.constant 1 : index
    %c8_36 = arith.constant 8 : index
    %92 = vector.load %arg5[%c1_35, %c8_36] : memref<2x48xf32, #tpu.memory_space<vmem>>, vector<1x8xf32>
    tpu.vector_store %arg5[%c1_35, %c8_36], %91 {strides = array<i32>} : memref<2x48xf32, #tpu.memory_space<vmem>>, vector<1x8xf32>,
    %93 = vector.extract_strided_slice %76 {offsets = [32, 0], sizes = [1, 8], strides = [1, 1]} : vector<48x8xf32> to vector<1x8xf32>
    %c1_37 = arith.constant 1 : index
    %c16_38 = arith.constant 16 : index
    %94 = vector.load %arg5[%c1_37, %c16_38] : memref<2x48xf32, #tpu.memory_space<vmem>>, vector<1x8xf32>
    tpu.vector_store %arg5[%c1_37, %c16_38], %93 {strides = array<i32>} : memref<2x48xf32, #tpu.memory_space<vmem>>, vector<1x8xf32>,
    %95 = vector.extract_strided_slice %76 {offsets = [36, 0], sizes = [1, 8], strides = [1, 1]} : vector<48x8xf32> to vector<1x8xf32>
    %c1_39 = arith.constant 1 : index
    %c24_40 = arith.constant 24 : index
    %96 = vector.load %arg5[%c1_39, %c24_40] : memref<2x48xf32, #tpu.memory_space<vmem>>, vector<1x8xf32>
    tpu.vector_store %arg5[%c1_39, %c24_40], %95 {strides = array<i32>} : memref<2x48xf32, #tpu.memory_space<vmem>>, vector<1x8xf32>,
    %97 = vector.extract_strided_slice %76 {offsets = [40, 0], sizes = [1, 8], strides = [1, 1]} : vector<48x8xf32> to vector<1x8xf32>
    %c1_41 = arith.constant 1 : index
    %c32_42 = arith.constant 32 : index
    %98 = vector.load %arg5[%c1_41, %c32_42] : memref<2x48xf32, #tpu.memory_space<vmem>>, vector<1x8xf32>
    tpu.vector_store %arg5[%c1_41, %c32_42], %97 {strides = array<i32>} : memref<2x48xf32, #tpu.memory_space<vmem>>, vector<1x8xf32>,
    %99 = vector.extract_strided_slice %76 {offsets = [44, 0], sizes = [1, 8], strides = [1, 1]} : vector<48x8xf32> to vector<1x8xf32>
    %c1_43 = arith.constant 1 : index
    %c40_44 = arith.constant 40 : index
    %100 = vector.load %arg5[%c1_43, %c40_44] : memref<2x48xf32, #tpu.memory_space<vmem>>, vector<1x8xf32>
    tpu.vector_store %arg5[%c1_43, %c40_44], %99 {strides = array<i32>} : memref<2x48xf32, #tpu.memory_space<vmem>>, vector<1x8xf32>,
    %c0_45 = arith.constant 0 : index
    %c0_46 = arith.constant 0 : index
    %101 = vector.load %arg5[%c0_45, %c0_46] : memref<2x48xf32, #tpu.memory_space<vmem>>, vector<2x48xf32>
    %c24_47 = arith.constant 24 : index
    %c0_48 = arith.constant 0 : index
    %102 = vector.load %arg3[%c24_47, %c0_48] : memref<80x8xf32, #tpu.memory_space<vmem>>, vector<48x4xf32>
    %cst_49 = arith.constant dense<0.000000e+00> : vector<2x4xf32>
    %103 = tpu.matmul %101, %102, %cst_49 {dimension_numbers = #tpu.dot_dimension_numbers<[1], [0], [0], [1], [0, 0, 1, 1], [], []>} : vector<2x48xf32>, vector<48x4xf32>, vector<2x4xf32> -> vector<2x4xf32>
    %c75 = arith.constant 75 : index
    %c0_50 = arith.constant 0 : index
    %104 = vector.load %arg3[%c75, %c0_50] : memref<80x8xf32, #tpu.memory_space<vmem>>, vector<1x4xf32>
    %105 = vector.broadcast %104 : vector<1x4xf32> to vector<2x4xf32>
    %106 = arith.addf %103, %105 : vector<2x4xf32>
    %cst_51 = arith.constant dense<0xFF800000> : vector<2xf32>
    %107 = vector.multi_reduction <maximumf>, %106, %cst_51 [1] : vector<2x4xf32> to vector<2xf32>
    %108 = vector.shape_cast %107 : vector<2xf32> to vector<2x1xf32>
    %109 = vector.broadcast %108 : vector<2x1xf32> to vector<2x4xf32>
    %110 = arith.subf %106, %109 : vector<2x4xf32>
    %111 = math.exp %110 : vector<2x4xf32>
    %cst_52 = arith.constant dense<0.000000e+00> : vector<2xf32>
    %112 = vector.multi_reduction <add>, %111, %cst_52 [1] : vector<2x4xf32> to vector<2xf32>
    %113 = vector.shape_cast %112 : vector<2xf32> to vector<2x1xf32>
    %114 = vector.broadcast %113 : vector<2x1xf32> to vector<2x4xf32>
    %115 = arith.divf %111, %114 : vector<2x4xf32>
    %c0_53 = arith.constant 0 : index
    %c0_54 = arith.constant 0 : index
    %116 = vector.load %arg4[%c0_53, %c0_54] : memref<2x4xf32, #tpu.memory_space<vmem>>, vector<2x4xf32>
    tpu.vector_store %arg4[%c0_53, %c0_54], %115 {strides = array<i32>} : memref<2x4xf32, #tpu.memory_space<vmem>>, vector<2x4xf32>,
    return
  }
  func.func @transform_0(%arg0: i32) -> (i32, i32) {
    %c0_i32 = arith.constant 0 : i32
    %c0_i32_0 = arith.constant 0 : i32
    return %arg0, %c0_i32 : i32, i32
  }
  func.func @transform_1(%arg0: i32) -> (i32, i32) {
    %c0_i32 = arith.constant 0 : i32
    %c0_i32_0 = arith.constant 0 : i32
    %c0_i32_1 = arith.constant 0 : i32
    return %c0_i32, %c0_i32_0 : i32, i32
  }
  func.func @transform_2(%arg0: i32) -> (i32, i32) {
    %c0_i32 = arith.constant 0 : i32
    %c0_i32_0 = arith.constant 0 : i32
    %c0_i32_1 = arith.constant 0 : i32
    return %c0_i32, %c0_i32_0 : i32, i32
  }
  func.func @transform_3(%arg0: i32) -> (i32, i32) {
    %c0_i32 = arith.constant 0 : i32
    %c0_i32_0 = arith.constant 0 : i32
    return %arg0, %c0_i32 : i32, i32
  }
}

</mosaic_0001>

<llo_original>
// kernel: model_forward.1
$region0: #{model_forward.1}
  #allocation0 [shape = 'u32[]', space=smem, size = 0x4, offset = 0x4, fixed_abs, tag = 'smem constant byte address 0x4 - core index']
  #allocation1 [shape = 'u32[72,128]{1,0:T(1,128)}', space=vmem, size = 0x9000, scoped, tag = 'internal scratch']
  #allocation2 [shape = 'f32[2,48]{1,0:T(2,128)}', space=vmem, size = 0x400, scoped, tag = 'scratch operand']
  %s0 = inlined_call_operand.vmem [shape: bf16[48,720], index: 0, kind: input, shape index: {}]
  %s1 = inlined_call_operand.vmem [shape: bf16[720,2], index: 1, kind: input, shape index: {}]
  %s2 = inlined_call_operand.vmem [shape: f32[80,8], index: 2, kind: input, shape index: {}]
  %s3 = inlined_call_operand.hbm [shape: f32[2,4], index: 3, kind: output, shape index: {}]
  %s4 = sld [smem:[#allocation0]]
  $region22: #{model_forward.1} parent=0
    _
  %s6 = ssub.s32 1, %s4
  %s7 = scalar_select 0, %s6, %s4
  $region1: #{model_forward.1} parent=0
    #allocation3 [shape = 'u8[1024]{0}', space=vmem, size = 0x400, scoped, tag = 'output window, operand 0, single buffered']
    #allocation4 [shape = 's32[1]{0}', space=sflag, size = 0x4, scoped, tag = 'scoped memory for model_forward.1']
    %8 = vsyncpa [#allocation4], 0
    // Predicated region
    $region2: #{model_forward.1} parent=1 // pred_check
      _
    $region3: #{model_forward.1} parent=1 // pred_check_branch
      %10 = sbr.rel (0) target = $region5
    $region4: #{model_forward.1} parent=1 // pred_region
      _
    $region5: #{model_forward.1} parent=1 // pred_fallthru
      _
    // Predicated region
    $region6: #{model_forward.1} parent=1 // pred_check
      _
    $region7: #{model_forward.1} parent=1 // pred_check_branch
      %12 = sbr.rel (0) target = $region9
    $region8: #{model_forward.1} parent=1 // pred_region
      _
    $region9: #{model_forward.1} parent=1 // pred_fallthru
      _
    // Predicated region
    $region10: #{model_forward.1} parent=1 // pred_check
      _
    $region11: #{model_forward.1} parent=1 // pred_check_branch
      %14 = sbr.rel (0) target = $region13
    $region12: #{model_forward.1} parent=1 // pred_region
      _
    $region13: #{model_forward.1} parent=1 // pred_fallthru
      _
    %v16 = vld [vmem:[%s0] sm:$0xff]
    %v17 = vld [vmem:[%s0 + $0x8] sm:$0xff]
    %v18 = vld [vmem:[%s0 + $0x10] sm:$0xff]
    %v19 = vld [vmem:[%s0 + $0x18] sm:$0xff]
    %v20 = vld [vmem:[%s0 + $0x20] sm:$0xff]
    %v21 = vld [vmem:[%s0 + $0x28] sm:$0xff]
    %v22 = vld [vmem:[%s0 + $0x30] sm:$0xff]
    %v23 = vld [vmem:[%s0 + $0x38] sm:$0xff]
    %v24 = vld [vmem:[%s0 + $0x40] sm:$0xff]
    %v25 = vld [vmem:[%s0 + $0x48] sm:$0xff]
    %v26 = vld [vmem:[%s0 + $0x50] sm:$0xff]
    %v27 = vld [vmem:[%s0 + $0x58] sm:$0xff]
    %v28 = vld [vmem:[%s0 + $0x60] sm:$0xff]
    %v29 = vld [vmem:[%s0 + $0x68] sm:$0xff]
    %v30 = vld [vmem:[%s0 + $0x70] sm:$0xff]
    %v31 = vld [vmem:[%s0 + $0x78] sm:$0xff]
    %v32 = vld [vmem:[%s0 + $0x80] sm:$0xff]
    %v33 = vld [vmem:[%s0 + $0x88] sm:$0xff]
    %v34 = vld [vmem:[%s1] sm:$0xf]
    %v35 = vld [vmem:[%s1 + $0x4] sm:$0xf]
    %v36 = vld [vmem:[%s1 + $0x8] sm:$0xf]
    %v37 = vld [vmem:[%s1 + $0xc] sm:$0xf]
    %v38 = vld [vmem:[%s1 + $0x10] sm:$0xf]
    %v39 = vld [vmem:[%s1 + $0x14] sm:$0xf]
    %v40 = vld [vmem:[%s1 + $0x18] sm:$0xf]
    %v41 = vld [vmem:[%s1 + $0x1c] sm:$0xf]
    %v42 = vld [vmem:[%s1 + $0x20] sm:$0xf]
    %v43 = vld [vmem:[%s1 + $0x24] sm:$0xf]
    %v44 = vld [vmem:[%s1 + $0x28] sm:$0xf]
    %v45 = vld [vmem:[%s1 + $0x2c] sm:$0xf]
    %v46 = vld [vmem:[%s1 + $0x30] sm:$0xf]
    %v47 = vld [vmem:[%s1 + $0x34] sm:$0xf]
    %v48 = vld [vmem:[%s1 + $0x38] sm:$0xf]
    %v49 = vld [vmem:[%s1 + $0x3c] sm:$0xf]
    %v50 = vld [vmem:[%s1 + $0x40] sm:$0xf]
    %v51 = vld [vmem:[%s1 + $0x44] sm:$0xf]
    %v52 = vld [vmem:[%s1 + $0x48] sm:$0xf]
    %v53 = vld [vmem:[%s1 + $0x4c] sm:$0xf]
    %v54 = vld [vmem:[%s1 + $0x50] sm:$0xf]
    %v55 = vld [vmem:[%s1 + $0x54] sm:$0xf]
    %v56 = vld [vmem:[%s1 + $0x58] sm:$0xf]
    %v57 = vld [vmem:[%s1 + $0x5c] sm:$0xf]
    %v58 = vld [vmem:[%s1 + $0x60] sm:$0xf]
    %v59 = vld [vmem:[%s1 + $0x64] sm:$0xf]
    %v60 = vld [vmem:[%s1 + $0x68] sm:$0xf]
    %v61 = vld [vmem:[%s1 + $0x6c] sm:$0xf]
    %v62 = vld [vmem:[%s1 + $0x70] sm:$0xf]
    %v63 = vld [vmem:[%s1 + $0x74] sm:$0xf]
    %v64 = vld [vmem:[%s1 + $0x78] sm:$0xf]
    %v65 = vld [vmem:[%s1 + $0x7c] sm:$0xf]
    %v66 = vld [vmem:[%s1 + $0x80] sm:$0xf]
    %v67 = vld [vmem:[%s1 + $0x84] sm:$0xf]
    %v68 = vld [vmem:[%s1 + $0x88] sm:$0xf]
    %v69 = vld [vmem:[%s1 + $0x8c] sm:$0xf]
    %v70 = vld [vmem:[%s1 + $0x90] sm:$0xf]
    %v71 = vld [vmem:[%s1 + $0x94] sm:$0xf]
    %v72 = vld [vmem:[%s1 + $0x98] sm:$0xf]
    %v73 = vld [vmem:[%s1 + $0x9c] sm:$0xf]
    %v74 = vld [vmem:[%s1 + $0xa0] sm:$0xf]
    %v75 = vld [vmem:[%s1 + $0xa4] sm:$0xf]
    %v76 = vld [vmem:[%s1 + $0xa8] sm:$0xf]
    %v77 = vld [vmem:[%s1 + $0xac] sm:$0xf]
    %v78 = vld [vmem:[%s1 + $0xb0] sm:$0xf]
    %v79 = vld [vmem:[%s1 + $0xb4] sm:$0xf]
    %v80 = vld [vmem:[%s1 + $0xb8] sm:$0xf]
    %v81 = vld [vmem:[%s1 + $0xbc] sm:$0xf]
    %v82 = vld [vmem:[%s1 + $0xc0] sm:$0xf]
    %v83 = vld [vmem:[%s1 + $0xc4] sm:$0xf]
    %v84 = vld [vmem:[%s1 + $0xc8] sm:$0xf]
    %v85 = vld [vmem:[%s1 + $0xcc] sm:$0xf]
    %v86 = vld [vmem:[%s1 + $0xd0] sm:$0xf]
    %v87 = vld [vmem:[%s1 + $0xd4] sm:$0xf]
    %v88 = vld [vmem:[%s1 + $0xd8] sm:$0xf]
    %v89 = vld [vmem:[%s1 + $0xdc] sm:$0xf]
    %v90 = vld [vmem:[%s1 + $0xe0] sm:$0xf]
    %v91 = vld [vmem:[%s1 + $0xe4] sm:$0xf]
    %v92 = vld [vmem:[%s1 + $0xe8] sm:$0xf]
    %v93 = vld [vmem:[%s1 + $0xec] sm:$0xf]
    %v94 = vld [vmem:[%s1 + $0xf0] sm:$0xf]
    %v95 = vld [vmem:[%s1 + $0xf4] sm:$0xf]
    %v96 = vld [vmem:[%s1 + $0xf8] sm:$0xf]
    %v97 = vld [vmem:[%s1 + $0xfc] sm:$0xf]
    %v98 = vld [vmem:[%s1 + $0x100] sm:$0xf]
    %v99 = vld [vmem:[%s1 + $0x104] sm:$0xf]
    %v100 = vld [vmem:[%s1 + $0x108] sm:$0xf]
    %v101 = vld [vmem:[%s1 + $0x10c] sm:$0xf]
    %v102 = vld [vmem:[%s1 + $0x110] sm:$0xf]
    %v103 = vld [vmem:[%s1 + $0x114] sm:$0xf]
    %v104 = vld [vmem:[%s1 + $0x118] sm:$0xf]
    %v105 = vld [vmem:[%s1 + $0x11c] sm:$0xf]
    %v106 = vld [vmem:[%s1 + $0x120] sm:$0xf]
    %v107 = vld [vmem:[%s1 + $0x124] sm:$0xf]
    %v108 = vld [vmem:[%s1 + $0x128] sm:$0xf]
    %v109 = vld [vmem:[%s1 + $0x12c] sm:$0xf]
    %v110 = vld [vmem:[%s1 + $0x130] sm:$0xf]
    %v111 = vld [vmem:[%s1 + $0x134] sm:$0xf]
    %v112 = vld [vmem:[%s1 + $0x138] sm:$0xf]
    %v113 = vld [vmem:[%s1 + $0x13c] sm:$0xf]
    %v114 = vld [vmem:[%s1 + $0x140] sm:$0xf]
    %v115 = vld [vmem:[%s1 + $0x144] sm:$0xf]
    %v116 = vld [vmem:[%s1 + $0x148] sm:$0xf]
    %v117 = vld [vmem:[%s1 + $0x14c] sm:$0xf]
    %v118 = vld [vmem:[%s1 + $0x150] sm:$0xf]
    %v119 = vld [vmem:[%s1 + $0x154] sm:$0xf]
    %v120 = vld [vmem:[%s1 + $0x158] sm:$0xf]
    %v121 = vld [vmem:[%s1 + $0x15c] sm:$0xf]
    %v122 = vld [vmem:[%s1 + $0x160] sm:$0xf]
    %v123 = vld [vmem:[%s1 + $0x164] sm:$0xf]
    %v124 = vld [vmem:[%s2 + $0x48] sm:$0x1]
    %v125 = vperm.slane %v124, 0
    %v144 = vunpack.c.l.b16 %v16
    %v145 = vunpack.c.h.b16 %v16
    %v146 = vunpack.c.l.b16 %v17
    %v147 = vunpack.c.h.b16 %v17
    %v148 = vunpack.c.l.b16 %v18
    %v149 = vunpack.c.h.b16 %v18
    %v150 = vunpack.c.l.b16 %v19
    %v151 = vunpack.c.h.b16 %v19
    %v152 = vunpack.c.l.b16 %v20
    %v153 = vunpack.c.h.b16 %v20
    %v154 = vunpack.c.l.b16 %v21
    %v155 = vunpack.c.h.b16 %v21
    %v156 = vunpack.c.l.b16 %v22
    %v157 = vunpack.c.h.b16 %v22
    %v158 = vunpack.c.l.b16 %v23
    %v159 = vunpack.c.h.b16 %v23
    %v160 = vunpack.c.l.b16 %v24
    %v161 = vunpack.c.h.b16 %v24
    %v162 = vunpack.c.l.b16 %v25
    %v163 = vunpack.c.h.b16 %v25
    %v164 = vunpack.c.l.b16 %v26
    %v165 = vunpack.c.h.b16 %v26
    %v166 = vunpack.c.l.b16 %v27
    %v167 = vunpack.c.h.b16 %v27
    %v168 = vunpack.c.l.b16 %v28
    %v169 = vunpack.c.h.b16 %v28
    %v170 = vunpack.c.l.b16 %v29
    %v171 = vunpack.c.h.b16 %v29
    %v172 = vunpack.c.l.b16 %v30
    %v173 = vunpack.c.h.b16 %v30
    %v174 = vunpack.c.l.b16 %v31
    %v175 = vunpack.c.h.b16 %v31
    %v176 = vunpack.c.l.b16 %v32
    %v177 = vunpack.c.h.b16 %v32
    %v178 = vunpack.c.l.b16 %v33
    %v179 = vunpack.c.h.b16 %v33
    %v180 = vpack.c.b16 %v150, %v144
    %v181 = vpack.c.b16 %v151, %v145
    %v182 = vpack.c.b16 %v152, %v146
    %v183 = vpack.c.b16 %v153, %v147
    %v184 = vpack.c.b16 %v154, %v148
    %v185 = vpack.c.b16 %v155, %v149
    %v186 = vpack.c.b16 %v162, %v156
    %v187 = vpack.c.b16 %v163, %v157
    %v188 = vpack.c.b16 %v164, %v158
    %v189 = vpack.c.b16 %v165, %v159
    %v190 = vpack.c.b16 %v166, %v160
    %v191 = vpack.c.b16 %v167, %v161
    %v192 = vpack.c.b16 %v174, %v168
    %v193 = vpack.c.b16 %v175, %v169
    %v194 = vpack.c.b16 %v176, %v170
    %v195 = vpack.c.b16 %v177, %v171
    %v196 = vpack.c.b16 %v178, %v172
    %v197 = vpack.c.b16 %v179, %v173
    %v303 = vunpack.c.l.b16 %v34
    %v304 = vunpack.c.l.b16 %v35
    %v305 = vunpack.c.l.b16 %v36
    %v306 = vunpack.c.l.b16 %v37
    %v307 = vunpack.c.l.b16 %v38
    %v308 = vunpack.c.l.b16 %v39
    %v309 = vunpack.c.l.b16 %v40
    %v310 = vunpack.c.l.b16 %v41
    %v311 = vunpack.c.l.b16 %v42
    %v312 = vunpack.c.l.b16 %v43
    %v313 = vunpack.c.l.b16 %v44
    %v314 = vunpack.c.l.b16 %v45
    %v315 = vunpack.c.l.b16 %v46
    %v316 = vunpack.c.l.b16 %v47
    %v317 = vunpack.c.l.b16 %v48
    %v318 = vunpack.c.l.b16 %v49
    %v319 = vunpack.c.l.b16 %v50
    %v320 = vunpack.c.l.b16 %v51
    %v321 = vunpack.c.l.b16 %v52
    %v322 = vunpack.c.l.b16 %v53
    %v323 = vunpack.c.l.b16 %v54
    %v324 = vunpack.c.l.b16 %v55
    %v325 = vunpack.c.l.b16 %v56
    %v326 = vunpack.c.l.b16 %v57
    %v327 = vunpack.c.l.b16 %v58
    %v328 = vunpack.c.l.b16 %v59
    %v329 = vunpack.c.l.b16 %v60
    %v330 = vunpack.c.l.b16 %v61
    %v331 = vunpack.c.l.b16 %v62
    %v332 = vunpack.c.l.b16 %v63
    %v333 = vunpack.c.l.b16 %v64
    %v334 = vunpack.c.l.b16 %v65
    %v335 = vunpack.c.l.b16 %v66
    %v336 = vunpack.c.l.b16 %v67
    %v337 = vunpack.c.l.b16 %v68
    %v338 = vunpack.c.l.b16 %v69
    %v339 = vunpack.c.l.b16 %v70
    %v340 = vunpack.c.l.b16 %v71
    %v341 = vunpack.c.l.b16 %v72
    %v342 = vunpack.c.l.b16 %v73
    %v343 = vunpack.c.l.b16 %v74
    %v344 = vunpack.c.l.b16 %v75
    %v345 = vunpack.c.l.b16 %v76
    %v346 = vunpack.c.l.b16 %v77
    %v347 = vunpack.c.l.b16 %v78
    %v348 = vunpack.c.l.b16 %v79
    %v349 = vunpack.c.l.b16 %v80
    %v350 = vunpack.c.l.b16 %v81
    %v351 = vunpack.c.l.b16 %v82
    %v352 = vunpack.c.l.b16 %v83
    %v353 = vunpack.c.l.b16 %v84
    %v354 = vunpack.c.l.b16 %v85
    %v355 = vunpack.c.l.b16 %v86
    %v356 = vunpack.c.l.b16 %v87
    %v357 = vunpack.c.l.b16 %v88
    %v358 = vunpack.c.l.b16 %v89
    %v359 = vunpack.c.l.b16 %v90
    %v360 = vunpack.c.l.b16 %v91
    %v361 = vunpack.c.l.b16 %v92
    %v362 = vunpack.c.l.b16 %v93
    %v363 = vunpack.c.l.b16 %v94
    %v364 = vunpack.c.l.b16 %v95
    %v365 = vunpack.c.l.b16 %v96
    %v366 = vunpack.c.l.b16 %v97
    %v367 = vunpack.c.l.b16 %v98
    %v368 = vunpack.c.l.b16 %v99
    %v369 = vunpack.c.l.b16 %v100
    %v370 = vunpack.c.l.b16 %v101
    %v371 = vunpack.c.l.b16 %v102
    %v372 = vunpack.c.l.b16 %v103
    %v373 = vunpack.c.l.b16 %v104
    %v374 = vunpack.c.l.b16 %v105
    %v375 = vunpack.c.l.b16 %v106
    %v376 = vunpack.c.l.b16 %v107
    %v377 = vunpack.c.l.b16 %v108
    %v378 = vunpack.c.l.b16 %v109
    %v379 = vunpack.c.l.b16 %v110
    %v380 = vunpack.c.l.b16 %v111
    %v381 = vunpack.c.l.b16 %v112
    %v382 = vunpack.c.l.b16 %v113
    %v383 = vunpack.c.l.b16 %v114
    %v384 = vunpack.c.l.b16 %v115
    %v385 = vunpack.c.l.b16 %v116
    %v386 = vunpack.c.l.b16 %v117
    %v387 = vunpack.c.l.b16 %v118
    %v388 = vunpack.c.l.b16 %v119
    %v389 = vunpack.c.l.b16 %v120
    %v390 = vunpack.c.l.b16 %v121
    %v391 = vunpack.c.l.b16 %v122
    %v392 = vunpack.c.l.b16 %v123
    %v393 = vpack.c.b16 %v304, %v303
    %v394 = vpack.c.b16 %v306, %v305
    %v395 = vpack.c.b16 %v308, %v307
    %v396 = vpack.c.b16 %v310, %v309
    %v397 = vpack.c.b16 %v312, %v311
    %v398 = vpack.c.b16 %v314, %v313
    %v399 = vpack.c.b16 %v316, %v315
    %v400 = vpack.c.b16 %v318, %v317
    %v401 = vpack.c.b16 %v320, %v319
    %v402 = vpack.c.b16 %v322, %v321
    %v403 = vpack.c.b16 %v324, %v323
    %v404 = vpack.c.b16 %v326, %v325
    %v405 = vpack.c.b16 %v328, %v327
    %v406 = vpack.c.b16 %v330, %v329
    %v407 = vpack.c.b16 %v332, %v331
    %v408 = vpack.c.b16 %v334, %v333
    %v409 = vpack.c.b16 %v336, %v335
    %v410 = vpack.c.b16 %v338, %v337
    %v411 = vpack.c.b16 %v340, %v339
    %v412 = vpack.c.b16 %v342, %v341
    %v413 = vpack.c.b16 %v344, %v343
    %v414 = vpack.c.b16 %v346, %v345
    %v415 = vpack.c.b16 %v348, %v347
    %v416 = vpack.c.b16 %v350, %v349
    %v417 = vpack.c.b16 %v352, %v351
    %v418 = vpack.c.b16 %v354, %v353
    %v419 = vpack.c.b16 %v356, %v355
    %v420 = vpack.c.b16 %v358, %v357
    %v421 = vpack.c.b16 %v360, %v359
    %v422 = vpack.c.b16 %v362, %v361
    %v423 = vpack.c.b16 %v364, %v363
    %v424 = vpack.c.b16 %v366, %v365
    %v425 = vpack.c.b16 %v368, %v367
    %v426 = vpack.c.b16 %v370, %v369
    %v427 = vpack.c.b16 %v372, %v371
    %v428 = vpack.c.b16 %v374, %v373
    %v429 = vpack.c.b16 %v376, %v375
    %v430 = vpack.c.b16 %v378, %v377
    %v431 = vpack.c.b16 %v380, %v379
    %v432 = vpack.c.b16 %v382, %v381
    %v433 = vpack.c.b16 %v384, %v383
    %v434 = vpack.c.b16 %v386, %v385
    %v435 = vpack.c.b16 %v388, %v387
    %v436 = vpack.c.b16 %v390, %v389
    %v437 = vpack.c.b16 %v392, %v391
    %vm483 = vcmask 654336
    %v485 = vsel %vm483, %v185, 0
    %v488 = vsel %vm483, %v191, 0
    %v491 = vsel %vm483, %v197, 0
    %493 = vmatpush.bf16.msra.mxu0 %v400
    %494 = vmatpush.bf16.msra.mxu0 %v399
    %495 = vmatpush.bf16.msra.mxu0 %v398
    %496 = vmatpush.bf16.msra.mxu0 %v397
    %497 = vmatpush.bf16.msra.mxu0 %v396
    %498 = vmatpush.bf16.msra.mxu0 %v395
    %499 = vmatpush.bf16.msra.mxu0 %v394
    %500 = vmatpush.bf16.msra.mxu0 %v393
    %501 = vmatmul.bf16.gmra.mxu0 %v180
    %v502 = vpop.f32.mrf.mxu0
    %v503 = vadd.f32 %v125, %v502
    %v504 = vpop.f32.mrf.mxu0
    %v505 = vadd.f32 %v125, %v504
    %506 = vmatmul.bf16.gmra.mxu0 %v186
    %v507 = vpop.f32.mrf.mxu0
    %v508 = vadd.f32 %v125, %v507
    %v509 = vpop.f32.mrf.mxu0
    %v510 = vadd.f32 %v125, %v509
    %511 = vmatmul.bf16.gmra.mxu0 %v192
    %v512 = vpop.f32.mrf.mxu0
    %v513 = vadd.f32 %v125, %v512
    %v514 = vpop.f32.mrf.mxu0
    %v515 = vadd.f32 %v125, %v514
    %516 = vdwg.mxu0
    %517 = vmatpush.bf16.msra.mxu0 %v408
    %518 = vmatpush.bf16.msra.mxu0 %v407
    %519 = vmatpush.bf16.msra.mxu0 %v406
    %520 = vmatpush.bf16.msra.mxu0 %v405
    %521 = vmatpush.bf16.msra.mxu0 %v404
    %522 = vmatpush.bf16.msra.mxu0 %v403
    %523 = vmatpush.bf16.msra.mxu0 %v402
    %524 = vmatpush.bf16.msra.mxu0 %v401
    %525 = vmatmul.bf16.gmra.mxu0 %v181
    %v526 = vpop.f32.mrf.mxu0
    %v527 = vadd.f32 %v503, %v526
    %v528 = vpop.f32.mrf.mxu0
    %v529 = vadd.f32 %v505, %v528
    %530 = vmatmul.bf16.gmra.mxu0 %v187
    %v531 = vpop.f32.mrf.mxu0
    %v532 = vadd.f32 %v508, %v531
    %v533 = vpop.f32.mrf.mxu0
    %v534 = vadd.f32 %v510, %v533
    %535 = vmatmul.bf16.gmra.mxu0 %v193
    %v536 = vpop.f32.mrf.mxu0
    %v537 = vadd.f32 %v513, %v536
    %v538 = vpop.f32.mrf.mxu0
    %v539 = vadd.f32 %v515, %v538
    %540 = vdwg.mxu0
    %541 = vmatpush.bf16.msra.mxu0 %v416
    %542 = vmatpush.bf16.msra.mxu0 %v415
    %543 = vmatpush.bf16.msra.mxu0 %v414
    %544 = vmatpush.bf16.msra.mxu0 %v413
    %545 = vmatpush.bf16.msra.mxu0 %v412
    %546 = vmatpush.bf16.msra.mxu0 %v411
    %547 = vmatpush.bf16.msra.mxu0 %v410
    %548 = vmatpush.bf16.msra.mxu0 %v409
    %549 = vmatmul.bf16.gmra.mxu0 %v182
    %v550 = vpop.f32.mrf.mxu0
    %v551 = vadd.f32 %v527, %v550
    %v552 = vpop.f32.mrf.mxu0
    %v553 = vadd.f32 %v529, %v552
    %554 = vmatmul.bf16.gmra.mxu0 %v188
    %v555 = vpop.f32.mrf.mxu0
    %v556 = vadd.f32 %v532, %v555
    %v557 = vpop.f32.mrf.mxu0
    %v558 = vadd.f32 %v534, %v557
    %559 = vmatmul.bf16.gmra.mxu0 %v194
    %v560 = vpop.f32.mrf.mxu0
    %v561 = vadd.f32 %v537, %v560
    %v562 = vpop.f32.mrf.mxu0
    %v563 = vadd.f32 %v539, %v562
    %564 = vdwg.mxu0
    %565 = vmatpush.bf16.msra.mxu0 %v424
    %566 = vmatpush.bf16.msra.mxu0 %v423
    %567 = vmatpush.bf16.msra.mxu0 %v422
    %568 = vmatpush.bf16.msra.mxu0 %v421
    %569 = vmatpush.bf16.msra.mxu0 %v420
    %570 = vmatpush.bf16.msra.mxu0 %v419
    %571 = vmatpush.bf16.msra.mxu0 %v418
    %572 = vmatpush.bf16.msra.mxu0 %v417
    %573 = vmatmul.bf16.gmra.mxu0 %v183
    %v574 = vpop.f32.mrf.mxu0
    %v575 = vadd.f32 %v551, %v574
    %v576 = vpop.f32.mrf.mxu0
    %v577 = vadd.f32 %v553, %v576
    %578 = vmatmul.bf16.gmra.mxu0 %v189
    %v579 = vpop.f32.mrf.mxu0
    %v580 = vadd.f32 %v556, %v579
    %v581 = vpop.f32.mrf.mxu0
    %v582 = vadd.f32 %v558, %v581
    %583 = vmatmul.bf16.gmra.mxu0 %v195
    %v584 = vpop.f32.mrf.mxu0
    %v585 = vadd.f32 %v561, %v584
    %v586 = vpop.f32.mrf.mxu0
    %v587 = vadd.f32 %v563, %v586
    %588 = vdwg.mxu0
    %589 = vmatpush.bf16.msra.mxu0 %v432
    %590 = vmatpush.bf16.msra.mxu0 %v431
    %591 = vmatpush.bf16.msra.mxu0 %v430
    %592 = vmatpush.bf16.msra.mxu0 %v429
    %593 = vmatpush.bf16.msra.mxu0 %v428
    %594 = vmatpush.bf16.msra.mxu0 %v427
    %595 = vmatpush.bf16.msra.mxu0 %v426
    %596 = vmatpush.bf16.msra.mxu0 %v425
    %597 = vmatmul.bf16.gmra.mxu0 %v184
    %v598 = vpop.f32.mrf.mxu0
    %v599 = vadd.f32 %v575, %v598
    %v600 = vpop.f32.mrf.mxu0
    %v601 = vadd.f32 %v577, %v600
    %602 = vmatmul.bf16.gmra.mxu0 %v190
    %v603 = vpop.f32.mrf.mxu0
    %v604 = vadd.f32 %v580, %v603
    %v605 = vpop.f32.mrf.mxu0
    %v606 = vadd.f32 %v582, %v605
    %607 = vmatmul.bf16.gmra.mxu0 %v196
    %v608 = vpop.f32.mrf.mxu0
    %v609 = vadd.f32 %v585, %v608
    %v610 = vpop.f32.mrf.mxu0
    %v611 = vadd.f32 %v587, %v610
    %612 = vdwg.mxu0
    %613 = vmatpush.bf16.msra.mxu0 0
    %614 = vmatpush.bf16.msra.mxu0 0
    %615 = vmatpush.bf16.msra.mxu0 0
    %616 = vmatpush.bf16.msra.mxu0 %v437
    %617 = vmatpush.bf16.msra.mxu0 %v436
    %618 = vmatpush.bf16.msra.mxu0 %v435
    %619 = vmatpush.bf16.msra.mxu0 %v434
    %620 = vmatpush.bf16.msra.mxu0 %v433
    %621 = vmatmul.bf16.gmra.mxu0 %v485
    %v622 = vpop.f32.mrf.mxu0
    %v623 = vadd.f32 %v599, %v622
    %v624 = vpop.f32.mrf.mxu0
    %v625 = vadd.f32 %v601, %v624
    %626 = vmatmul.bf16.gmra.mxu0 %v488
    %v627 = vpop.f32.mrf.mxu0
    %v628 = vadd.f32 %v604, %v627
    %v629 = vpop.f32.mrf.mxu0
    %v630 = vadd.f32 %v606, %v629
    %631 = vmatmul.bf16.gmra.mxu0 %v491
    %v632 = vpop.f32.mrf.mxu0
    %v633 = vadd.f32 %v609, %v632
    %v634 = vpop.f32.mrf.mxu0
    %v635 = vadd.f32 %v611, %v634
    %636 = vdwg.mxu0
    %v637 = vmax.f32 %v623, 0.0
    %v638 = vmax.f32 %v625, 0.0
    %v639 = vmax.f32 %v628, 0.0
    %v640 = vmax.f32 %v630, 0.0
    %v641 = vmax.f32 %v633, 0.0
    %v642 = vmax.f32 %v635, 0.0
    %v643 = vlaneseq
    %v644 = vshrl.u32 %v643, 7
    %v645 = vadd.s32 %v644, 8
    %v646 = vadd.s32 %v644, 16
    %v647 = vadd.s32 %v644, 24
    %v648 = vadd.s32 %v644, 32
    %v649 = vadd.s32 %v644, 40
    %vm650 = vcmp.lt.s32.totalorder %v644, 0
    %v651 = vsub.s32 0, %v644
    %v652 = vsel %vm650, %v651, %v644
    %v653 = vand.u32 %v652, 65535
    %v654 = vshrl.u32 %v652, 16
    %v656 = vmul.u32 %v653, 43691
    %v657 = vmul.u32 %v653, 43690
    %v658 = vmul.u32 %v654, 43691
    %v659 = vmul.u32 %v654, 43690
    %v660 = vshll.u32 %v657, 16
    %v661 = vshrl.u32 %v657, 16
    %v662 = vshll.u32 %v658, 16
    %v663 = vshrl.u32 %v658, 16
    %vm664 = vc.u32 %v656, %v660
    %v665 = vsel %vm664, 1, 0
    %v666 = vadd.s32 %v656, %v660
    %v667 = vadd.s32 %v659, %v665
    %vm668 = vc.u32 %v666, %v662
    %v669 = vsel %vm668, 1, 0
    %v670 = vadd.s32 %v666, %v662
    %v671 = vadd.s32 %v667, %v669
    %v672 = vadd.s32 %v671, %v661
    %v673 = vadd.s32 %v672, %v663
    %v674 = vshrl.u32 %v673, 4
    %v675 = vmul.u32 %v674, 24
    %v676 = vsub.s32 %v652, %v675
    %v677 = vsub.s32 0, %v676
    %v678 = vsel %vm650, %v677, %v676
    %vm679 = vcmp.lt.s32.totalorder %v645, 0
    %v680 = vsub.s32 0, %v645
    %v681 = vsel %vm679, %v680, %v645
    %v682 = vand.u32 %v681, 65535
    %v683 = vshrl.u32 %v681, 16
    %v685 = vmul.u32 %v682, 43691
    %v686 = vmul.u32 %v682, 43690
    %v687 = vmul.u32 %v683, 43691
    %v688 = vmul.u32 %v683, 43690
    %v689 = vshll.u32 %v686, 16
    %v690 = vshrl.u32 %v686, 16
    %v691 = vshll.u32 %v687, 16
    %v692 = vshrl.u32 %v687, 16
    %vm693 = vc.u32 %v685, %v689
    %v694 = vsel %vm693, 1, 0
    %v695 = vadd.s32 %v685, %v689
    %v696 = vadd.s32 %v688, %v694
    %vm697 = vc.u32 %v695, %v691
    %v698 = vsel %vm697, 1, 0
    %v699 = vadd.s32 %v695, %v691
    %v700 = vadd.s32 %v696, %v698
    %v701 = vadd.s32 %v700, %v690
    %v702 = vadd.s32 %v701, %v692
    %v703 = vshrl.u32 %v702, 4
    %v704 = vmul.u32 %v703, 24
    %v705 = vsub.s32 %v681, %v704
    %v706 = vsub.s32 0, %v705
    %v707 = vsel %vm679, %v706, %v705
    %vm708 = vcmp.lt.s32.totalorder %v646, 0
    %v709 = vsub.s32 0, %v646
    %v710 = vsel %vm708, %v709, %v646
    %v711 = vand.u32 %v710, 65535
    %v712 = vshrl.u32 %v710, 16
    %v714 = vmul.u32 %v711, 43691
    %v715 = vmul.u32 %v711, 43690
    %v716 = vmul.u32 %v712, 43691
    %v717 = vmul.u32 %v712, 43690
    %v718 = vshll.u32 %v715, 16
    %v719 = vshrl.u32 %v715, 16
    %v720 = vshll.u32 %v716, 16
    %v721 = vshrl.u32 %v716, 16
    %vm722 = vc.u32 %v714, %v718
    %v723 = vsel %vm722, 1, 0
    %v724 = vadd.s32 %v714, %v718
    %v725 = vadd.s32 %v717, %v723
    %vm726 = vc.u32 %v724, %v720
    %v727 = vsel %vm726, 1, 0
    %v728 = vadd.s32 %v724, %v720
    %v729 = vadd.s32 %v725, %v727
    %v730 = vadd.s32 %v729, %v719
    %v731 = vadd.s32 %v730, %v721
    %v732 = vshrl.u32 %v731, 4
    %v733 = vmul.u32 %v732, 24
    %v734 = vsub.s32 %v710, %v733
    %v735 = vsub.s32 0, %v734
    %v736 = vsel %vm708, %v735, %v734
    %vm737 = vcmp.lt.s32.totalorder %v647, 0
    %v738 = vsub.s32 0, %v647
    %v739 = vsel %vm737, %v738, %v647
    %v740 = vand.u32 %v739, 65535
    %v741 = vshrl.u32 %v739, 16
    %v743 = vmul.u32 %v740, 43691
    %v744 = vmul.u32 %v740, 43690
    %v745 = vmul.u32 %v741, 43691
    %v746 = vmul.u32 %v741, 43690
    %v747 = vshll.u32 %v744, 16
    %v748 = vshrl.u32 %v744, 16
    %v749 = vshll.u32 %v745, 16
    %v750 = vshrl.u32 %v745, 16
    %vm751 = vc.u32 %v743, %v747
    %v752 = vsel %vm751, 1, 0
    %v753 = vadd.s32 %v743, %v747
    %v754 = vadd.s32 %v746, %v752
    %vm755 = vc.u32 %v753, %v749
    %v756 = vsel %vm755, 1, 0
    %v757 = vadd.s32 %v753, %v749
    %v758 = vadd.s32 %v754, %v756
    %v759 = vadd.s32 %v758, %v748
    %v760 = vadd.s32 %v759, %v750
    %v761 = vshrl.u32 %v760, 4
    %v762 = vmul.u32 %v761, 24
    %v763 = vsub.s32 %v739, %v762
    %v764 = vsub.s32 0, %v763
    %v765 = vsel %vm737, %v764, %v763
    %vm766 = vcmp.lt.s32.totalorder %v648, 0
    %v767 = vsub.s32 0, %v648
    %v768 = vsel %vm766, %v767, %v648
    %v769 = vand.u32 %v768, 65535
    %v770 = vshrl.u32 %v768, 16
    %v772 = vmul.u32 %v769, 43691
    %v773 = vmul.u32 %v769, 43690
    %v774 = vmul.u32 %v770, 43691
    %v775 = vmul.u32 %v770, 43690
    %v776 = vshll.u32 %v773, 16
    %v777 = vshrl.u32 %v773, 16
    %v778 = vshll.u32 %v774, 16
    %v779 = vshrl.u32 %v774, 16
    %vm780 = vc.u32 %v772, %v776
    %v781 = vsel %vm780, 1, 0
    %v782 = vadd.s32 %v772, %v776
    %v783 = vadd.s32 %v775, %v781
    %vm784 = vc.u32 %v782, %v778
    %v785 = vsel %vm784, 1, 0
    %v786 = vadd.s32 %v782, %v778
    %v787 = vadd.s32 %v783, %v785
    %v788 = vadd.s32 %v787, %v777
    %v789 = vadd.s32 %v788, %v779
    %v790 = vshrl.u32 %v789, 4
    %v791 = vmul.u32 %v790, 24
    %v792 = vsub.s32 %v768, %v791
    %v793 = vsub.s32 0, %v792
    %v794 = vsel %vm766, %v793, %v792
    %vm795 = vcmp.lt.s32.totalorder %v649, 0
    %v796 = vsub.s32 0, %v649
    %v797 = vsel %vm795, %v796, %v649
    %v798 = vand.u32 %v797, 65535
    %v799 = vshrl.u32 %v797, 16
    %v801 = vmul.u32 %v798, 43691
    %v802 = vmul.u32 %v798, 43690
    %v803 = vmul.u32 %v799, 43691
    %v804 = vmul.u32 %v799, 43690
    %v805 = vshll.u32 %v802, 16
    %v806 = vshrl.u32 %v802, 16
    %v807 = vshll.u32 %v803, 16
    %v808 = vshrl.u32 %v803, 16
    %vm809 = vc.u32 %v801, %v805
    %v810 = vsel %vm809, 1, 0
    %v811 = vadd.s32 %v801, %v805
    %v812 = vadd.s32 %v804, %v810
    %vm813 = vc.u32 %v811, %v807
    %v814 = vsel %vm813, 1, 0
    %v815 = vadd.s32 %v811, %v807
    %v816 = vadd.s32 %v812, %v814
    %v817 = vadd.s32 %v816, %v806
    %v818 = vadd.s32 %v817, %v808
    %v819 = vshrl.u32 %v818, 4
    %v820 = vmul.u32 %v819, 24
    %v821 = vsub.s32 %v797, %v820
    %v822 = vsub.s32 0, %v821
    %v823 = vsel %vm795, %v822, %v821
    %vm824 = vcmp.ne.s32.totalorder %v678, 0
    %vm825 = vcmp.ne.s32.totalorder %v707, 0
    %vm826 = vcmp.ne.s32.totalorder %v736, 0
    %vm827 = vcmp.ne.s32.totalorder %v765, 0
    %vm828 = vcmp.ne.s32.totalorder %v794, 0
    %vm829 = vcmp.ne.s32.totalorder %v823, 0
    %vm830 = vcmp.lt.s32.totalorder %v678, 0
    %vm831 = vcmp.lt.s32.totalorder %v707, 0
    %vm832 = vcmp.lt.s32.totalorder %v736, 0
    %vm833 = vcmp.lt.s32.totalorder %v765, 0
    %vm834 = vcmp.lt.s32.totalorder %v794, 0
    %vm835 = vcmp.lt.s32.totalorder %v823, 0
    %vm836 = vmand %vm830, %vm824
    %vm837 = vmand %vm831, %vm825
    %vm838 = vmand %vm832, %vm826
    %vm839 = vmand %vm833, %vm827
    %vm840 = vmand %vm834, %vm828
    %vm841 = vmand %vm835, %vm829
    %v842 = vadd.s32 %v678, 24
    %v843 = vadd.s32 %v707, 24
    %v844 = vadd.s32 %v736, 24
    %v845 = vadd.s32 %v765, 24
    %v846 = vadd.s32 %v794, 24
    %v847 = vadd.s32 %v823, 24
    %v848 = vsel %vm836, %v842, %v678
    %v849 = vsel %vm837, %v843, %v707
    %v850 = vsel %vm838, %v844, %v736
    %v851 = vsel %vm839, %v845, %v765
    %v852 = vsel %vm840, %v846, %v794
    %v853 = vsel %vm841, %v847, %v823
    %vm860 = vcmask 1040384
    %v861 = vrot.slane %v637, 7
    %v862 = vrot.slane %v638, 7
    %v863 = vsel %vm860, %v861, %v862
    %v864 = vrot.slane %v639, 7
    %v865 = vsel %vm860, %v862, %v864
    %v866 = vrot.slane %v640, 7
    %v867 = vsel %vm860, %v864, %v866
    %v868 = vrot.slane %v641, 7
    %v869 = vsel %vm860, %v866, %v868
    %v870 = vrot.slane %v642, 7
    %v871 = vsel %vm860, %v868, %v870
    %v878 = vsel %vm860, 0.0, %v861
    %vm879 = vcmp.ge.s32.totalorder %v848, 1
    %vm880 = vcmp.ge.s32.totalorder %v849, 1
    %vm881 = vcmp.ge.s32.totalorder %v850, 1
    %vm882 = vcmp.ge.s32.totalorder %v851, 1
    %vm883 = vcmp.ge.s32.totalorder %v852, 1
    %vm884 = vcmp.ge.s32.totalorder %v853, 1
    %v885 = vsel %vm879, 1, 0
    %v886 = vsel %vm880, 1, 0
    %v887 = vsel %vm881, 1, 0
    %v888 = vsel %vm882, 1, 0
    %v889 = vsel %vm883, 1, 0
    %v890 = vsel %vm884, 1, 0
    %vm891 = vcmp.eq.s32.totalorder %v885, 1
    %vm892 = vcmp.eq.s32.totalorder %v886, 1
    %vm893 = vcmp.eq.s32.totalorder %v887, 1
    %vm894 = vcmp.eq.s32.totalorder %v888, 1
    %vm895 = vcmp.eq.s32.totalorder %v889, 1
    %vm896 = vcmp.eq.s32.totalorder %v890, 1
    %v897 = vsel %vm891, %v878, 0.0
    %v898 = vsel %vm892, %v863, 0.0
    %v899 = vsel %vm893, %v865, 0.0
    %v900 = vsel %vm894, %v867, 0.0
    %v901 = vsel %vm895, %v869, 0.0
    %v902 = vsel %vm896, %v871, 0.0
    %vm903 = vcmask 1046528
    %v904 = vrot.slane %v637, 1
    %v905 = vrot.slane %v638, 1
    %v906 = vsel %vm903, %v904, %v905
    %v907 = vrot.slane %v639, 1
    %v908 = vsel %vm903, %v905, %v907
    %v909 = vrot.slane %v640, 1
    %v910 = vsel %vm903, %v907, %v909
    %v911 = vrot.slane %v641, 1
    %v912 = vsel %vm903, %v909, %v911
    %v913 = vrot.slane %v642, 1
    %v914 = vsel %vm903, %v911, %v913
    %v921 = vsel %vm903, %v913, 0.0
    %vm922 = vcmp.le.s32.totalorder %v848, 22
    %vm923 = vcmp.le.s32.totalorder %v849, 22
    %vm924 = vcmp.le.s32.totalorder %v850, 22
    %vm925 = vcmp.le.s32.totalorder %v851, 22
    %vm926 = vcmp.le.s32.totalorder %v852, 22
    %vm927 = vcmp.le.s32.totalorder %v853, 22
    %v928 = vsel %vm922, 1, 0
    %v929 = vsel %vm923, 1, 0
    %v930 = vsel %vm924, 1, 0
    %v931 = vsel %vm925, 1, 0
    %v932 = vsel %vm926, 1, 0
    %v933 = vsel %vm927, 1, 0
    %vm934 = vcmp.eq.s32.totalorder %v928, 1
    %vm935 = vcmp.eq.s32.totalorder %v929, 1
    %vm936 = vcmp.eq.s32.totalorder %v930, 1
    %vm937 = vcmp.eq.s32.totalorder %v931, 1
    %vm938 = vcmp.eq.s32.totalorder %v932, 1
    %vm939 = vcmp.eq.s32.totalorder %v933, 1
    %v940 = vsel %vm934, %v906, 0.0
    %v941 = vsel %vm935, %v908, 0.0
    %v942 = vsel %vm936, %v910, 0.0
    %v943 = vsel %vm937, %v912, 0.0
    %v944 = vsel %vm938, %v914, 0.0
    %v945 = vsel %vm939, %v921, 0.0
    %946 = vrot.lane.b32.xlu0 %v637, 2
    %v947 = vpop.permute.xlu0 %946
    %948 = vrot.lane.b32.xlu0 %v638, 2
    %v949 = vpop.permute.xlu0 %948
    %950 = vrot.lane.b32.xlu0 %v639, 2
    %v951 = vpop.permute.xlu0 %950
    %952 = vrot.lane.b32.xlu0 %v640, 2
    %v953 = vpop.permute.xlu0 %952
    %954 = vrot.lane.b32.xlu0 %v641, 2
    %v955 = vpop.permute.xlu0 %954
    %956 = vrot.lane.b32.xlu0 %v642, 2
    %v957 = vpop.permute.xlu0 %956
    %970 = vrot.lane.b32.xlu0 %v940, 4
    %v971 = vpop.permute.xlu0 %970
    %972 = vrot.lane.b32.xlu0 %v941, 4
    %v973 = vpop.permute.xlu0 %972
    %974 = vrot.lane.b32.xlu0 %v942, 4
    %v975 = vpop.permute.xlu0 %974
    %976 = vrot.lane.b32.xlu0 %v943, 4
    %v977 = vpop.permute.xlu0 %976
    %978 = vrot.lane.b32.xlu0 %v944, 4
    %v979 = vpop.permute.xlu0 %978
    %980 = vrot.lane.b32.xlu0 %v945, 4
    %v981 = vpop.permute.xlu0 %980
    %vm988 = vcmask 15360
    %v989 = vsel %vm988, %v897, %v947
    %v990 = vsel %vm988, %v898, %v949
    %v991 = vsel %vm988, %v899, %v951
    %v992 = vsel %vm988, %v900, %v953
    %v993 = vsel %vm988, %v901, %v955
    %v994 = vsel %vm988, %v902, %v957
    %vm995 = vcmask 31744
    %v996 = vsel %vm995, %v989, %v971
    %v997 = vsel %vm995, %v990, %v973
    %v998 = vsel %vm995, %v991, %v975
    %v999 = vsel %vm995, %v992, %v977
    %v1000 = vsel %vm995, %v993, %v979
    %v1001 = vsel %vm995, %v994, %v981
    %v1002 = vld [vmem:[%s2] sm:$0x3f]
    %v1003 = vld [vmem:[%s2 + $0x49] sm:$0x1]
    %v1004 = vperm.slane %v1003, 0
    %vm1005 = vcmask 48128
    %v1007 = vsel %vm1005, %v996, 0
    %v1010 = vsel %vm1005, %v997, 0
    %v1013 = vsel %vm1005, %v998, 0
    %v1016 = vsel %vm1005, %v999, 0
    %v1019 = vsel %vm1005, %v1000, 0
    %v1022 = vsel %vm1005, %v1001, 0
    %vm1024 = vcmask 1045504
    %v1026 = vsel %vm1024, %v1002, 0
    %1028 = vmatpush.msra.mxu0 0.0
    %1029 = vmatpush.msra.mxu0 0.0
    %1030 = vmatpush.msra.mxu0 0.0
    %1031 = vmatpush.msra.mxu0 0.0
    %1032 = vmatpush.msra.mxu0 0.0
    %1033 = vmatpush.msra.mxu0 0.0
    %1034 = vmatpush.msra.mxu0 0.0
    %1035 = vmatpush.msra.mxu0 0.0
    %1036 = vmatpush.msra.mxu0 0.0
    %1037 = vmatpush.msra.mxu0 0.0
    %1038 = vmatpush.msra.mxu0 0.0
    %1039 = vmatpush.msra.mxu0 0.0
    %1040 = vmatpush.msra.mxu0 0.0
    %1041 = vmatpush.msra.mxu0 0.0
    %1042 = vmatpush.msra.mxu0 0.0
    %1043 = vmatpush.msra.mxu0 %v1026
    %1044 = vmatmul.f32.gmra.mxu0 %v1007
    %v1045 = vpop.f32.mrf.mxu0
    %v1046 = vadd.f32 %v1004, %v1045
    %1047 = vmatmul.f32.gmra.mxu0 %v1010
    %v1048 = vpop.f32.mrf.mxu0
    %v1049 = vadd.f32 %v1004, %v1048
    %1050 = vmatmul.f32.gmra.mxu0 %v1013
    %v1051 = vpop.f32.mrf.mxu0
    %v1052 = vadd.f32 %v1004, %v1051
    %1053 = vmatmul.f32.gmra.mxu0 %v1016
    %v1054 = vpop.f32.mrf.mxu0
    %v1055 = vadd.f32 %v1004, %v1054
    %1056 = vmatmul.f32.gmra.mxu0 %v1019
    %v1057 = vpop.f32.mrf.mxu0
    %v1058 = vadd.f32 %v1004, %v1057
    %1059 = vmatmul.f32.gmra.mxu0 %v1022
    %v1060 = vpop.f32.mrf.mxu0
    %v1061 = vadd.f32 %v1004, %v1060
    %1062 = vdwg.mxu0
    %v1063 = vmax.f32 %v1046, 0.0
    %v1064 = vmax.f32 %v1049, 0.0
    %v1065 = vmax.f32 %v1052, 0.0
    %v1066 = vmax.f32 %v1055, 0.0
    %v1067 = vmax.f32 %v1058, 0.0
    %v1068 = vmax.f32 %v1061, 0.0
    %vm1075 = vcmask 1041408
    %v1076 = vrot.slane %v1063, 6
    %v1077 = vrot.slane %v1064, 6
    %v1078 = vsel %vm1075, %v1076, %v1077
    %v1079 = vrot.slane %v1065, 6
    %v1080 = vsel %vm1075, %v1077, %v1079
    %v1081 = vrot.slane %v1066, 6
    %v1082 = vsel %vm1075, %v1079, %v1081
    %v1083 = vrot.slane %v1067, 6
    %v1084 = vsel %vm1075, %v1081, %v1083
    %v1085 = vrot.slane %v1068, 6
    %v1086 = vsel %vm1075, %v1083, %v1085
    %v1093 = vsel %vm1075, 0.0, %v1076
    %vm1094 = vcmp.ge.s32.totalorder %v848, 2
    %vm1095 = vcmp.ge.s32.totalorder %v849, 2
    %vm1096 = vcmp.ge.s32.totalorder %v850, 2
    %vm1097 = vcmp.ge.s32.totalorder %v851, 2
    %vm1098 = vcmp.ge.s32.totalorder %v852, 2
    %vm1099 = vcmp.ge.s32.totalorder %v853, 2
    %v1100 = vsel %vm1094, 1, 0
    %v1101 = vsel %vm1095, 1, 0
    %v1102 = vsel %vm1096, 1, 0
    %v1103 = vsel %vm1097, 1, 0
    %v1104 = vsel %vm1098, 1, 0
    %v1105 = vsel %vm1099, 1, 0
    %vm1106 = vcmp.eq.s32.totalorder %v1100, 1
    %vm1107 = vcmp.eq.s32.totalorder %v1101, 1
    %vm1108 = vcmp.eq.s32.totalorder %v1102, 1
    %vm1109 = vcmp.eq.s32.totalorder %v1103, 1
    %vm1110 = vcmp.eq.s32.totalorder %v1104, 1
    %vm1111 = vcmp.eq.s32.totalorder %v1105, 1
    %v1112 = vsel %vm1106, %v1093, 0.0
    %v1113 = vsel %vm1107, %v1078, 0.0
    %v1114 = vsel %vm1108, %v1080, 0.0
    %v1115 = vsel %vm1109, %v1082, 0.0
    %v1116 = vsel %vm1110, %v1084, 0.0
    %v1117 = vsel %vm1111, %v1086, 0.0
    %v1118 = vrot.slane %v1063, 2
    %v1119 = vrot.slane %v1064, 2
    %v1120 = vsel %vm1024, %v1118, %v1119
    %v1121 = vrot.slane %v1065, 2
    %v1122 = vsel %vm1024, %v1119, %v1121
    %v1123 = vrot.slane %v1066, 2
    %v1124 = vsel %vm1024, %v1121, %v1123
    %v1125 = vrot.slane %v1067, 2
    %v1126 = vsel %vm1024, %v1123, %v1125
    %v1127 = vrot.slane %v1068, 2
    %v1128 = vsel %vm1024, %v1125, %v1127
    %v1135 = vsel %vm1024, %v1127, 0.0
    %vm1136 = vcmp.le.s32.totalorder %v848, 21
    %vm1137 = vcmp.le.s32.totalorder %v849, 21
    %vm1138 = vcmp.le.s32.totalorder %v850, 21
    %vm1139 = vcmp.le.s32.totalorder %v851, 21
    %vm1140 = vcmp.le.s32.totalorder %v852, 21
    %vm1141 = vcmp.le.s32.totalorder %v853, 21
    %v1142 = vsel %vm1136, 1, 0
    %v1143 = vsel %vm1137, 1, 0
    %v1144 = vsel %vm1138, 1, 0
    %v1145 = vsel %vm1139, 1, 0
    %v1146 = vsel %vm1140, 1, 0
    %v1147 = vsel %vm1141, 1, 0
    %vm1148 = vcmp.eq.s32.totalorder %v1142, 1
    %vm1149 = vcmp.eq.s32.totalorder %v1143, 1
    %vm1150 = vcmp.eq.s32.totalorder %v1144, 1
    %vm1151 = vcmp.eq.s32.totalorder %v1145, 1
    %vm1152 = vcmp.eq.s32.totalorder %v1146, 1
    %vm1153 = vcmp.eq.s32.totalorder %v1147, 1
    %v1154 = vsel %vm1148, %v1120, 0.0
    %v1155 = vsel %vm1149, %v1122, 0.0
    %v1156 = vsel %vm1150, %v1124, 0.0
    %v1157 = vsel %vm1151, %v1126, 0.0
    %v1158 = vsel %vm1152, %v1128, 0.0
    %v1159 = vsel %vm1153, %v1135, 0.0
    %1160 = vrot.lane.b32.xlu0 %v1063, 4
    %v1161 = vpop.permute.xlu0 %1160
    %1162 = vrot.lane.b32.xlu0 %v1064, 4
    %v1163 = vpop.permute.xlu0 %1162
    %1164 = vrot.lane.b32.xlu0 %v1065, 4
    %v1165 = vpop.permute.xlu0 %1164
    %1166 = vrot.lane.b32.xlu0 %v1066, 4
    %v1167 = vpop.permute.xlu0 %1166
    %1168 = vrot.lane.b32.xlu0 %v1067, 4
    %v1169 = vpop.permute.xlu0 %1168
    %1170 = vrot.lane.b32.xlu0 %v1068, 4
    %v1171 = vpop.permute.xlu0 %1170
    %1184 = vrot.lane.b32.xlu0 %v1154, 8
    %v1185 = vpop.permute.xlu0 %1184
    %1186 = vrot.lane.b32.xlu0 %v1155, 8
    %v1187 = vpop.permute.xlu0 %1186
    %1188 = vrot.lane.b32.xlu0 %v1156, 8
    %v1189 = vpop.permute.xlu0 %1188
    %1190 = vrot.lane.b32.xlu0 %v1157, 8
    %v1191 = vpop.permute.xlu0 %1190
    %1192 = vrot.lane.b32.xlu0 %v1158, 8
    %v1193 = vpop.permute.xlu0 %1192
    %1194 = vrot.lane.b32.xlu0 %v1159, 8
    %v1195 = vpop.permute.xlu0 %1194
    %v1202 = vsel %vm995, %v1112, %v1161
    %v1203 = vsel %vm995, %v1113, %v1163
    %v1204 = vsel %vm995, %v1114, %v1165
    %v1205 = vsel %vm995, %v1115, %v1167
    %v1206 = vsel %vm995, %v1116, %v1169
    %v1207 = vsel %vm995, %v1117, %v1171
    %vm1208 = vcmask 64512
    %v1209 = vsel %vm1208, %v1202, %v1185
    %v1210 = vsel %vm1208, %v1203, %v1187
    %v1211 = vsel %vm1208, %v1204, %v1189
    %v1212 = vsel %vm1208, %v1205, %v1191
    %v1213 = vsel %vm1208, %v1206, %v1193
    %v1214 = vsel %vm1208, %v1207, %v1195
    %v1215 = vld [vmem:[%s2 + $0x8] sm:$0xff]
    %v1216 = vld [vmem:[%s2 + $0x10] sm:$0xf]
    %v1217 = vld [vmem:[%s2 + $0x4a] sm:$0x1]
    %v1218 = vperm.slane %v1217, 0
    %vm1219 = vcmask 97280
    %v1221 = vsel %vm1219, %v1209, 0
    %v1224 = vsel %vm1219, %v1210, 0
    %v1227 = vsel %vm1219, %v1211, 0
    %v1230 = vsel %vm1219, %v1212, 0
    %v1233 = vsel %vm1219, %v1213, 0
    %v1236 = vsel %vm1219, %v1214, 0
    %vm1238 = vcmask 1043456
    %v1240 = vsel %vm1238, %v1216, 0
    %1242 = vmatpush.msra.mxu0 0.0
    %1243 = vmatpush.msra.mxu0 0.0
    %1244 = vmatpush.msra.mxu0 0.0
    %1245 = vmatpush.msra.mxu0 0.0
    %1246 = vmatpush.msra.mxu0 0.0
    %1247 = vmatpush.msra.mxu0 0.0
    %1248 = vmatpush.msra.mxu0 0.0
    %1249 = vmatpush.msra.mxu0 0.0
    %1250 = vmatpush.msra.mxu0 0.0
    %1251 = vmatpush.msra.mxu0 0.0
    %1252 = vmatpush.msra.mxu0 0.0
    %1253 = vmatpush.msra.mxu0 0.0
    %1254 = vmatpush.msra.mxu0 0.0
    %1255 = vmatpush.msra.mxu0 0.0
    %1256 = vmatpush.msra.mxu0 %v1240
    %1257 = vmatpush.msra.mxu0 %v1215
    %1258 = vmatmul.f32.gmra.mxu0 %v1221
    %v1259 = vpop.f32.mrf.mxu0
    %v1260 = vadd.f32 %v1218, %v1259
    %1261 = vmatmul.f32.gmra.mxu0 %v1224
    %v1262 = vpop.f32.mrf.mxu0
    %v1263 = vadd.f32 %v1218, %v1262
    %1264 = vmatmul.f32.gmra.mxu0 %v1227
    %v1265 = vpop.f32.mrf.mxu0
    %v1266 = vadd.f32 %v1218, %v1265
    %1267 = vmatmul.f32.gmra.mxu0 %v1230
    %v1268 = vpop.f32.mrf.mxu0
    %v1269 = vadd.f32 %v1218, %v1268
    %1270 = vmatmul.f32.gmra.mxu0 %v1233
    %v1271 = vpop.f32.mrf.mxu0
    %v1272 = vadd.f32 %v1218, %v1271
    %1273 = vmatmul.f32.gmra.mxu0 %v1236
    %v1274 = vpop.f32.mrf.mxu0
    %v1275 = vadd.f32 %v1218, %v1274
    %1276 = vdwg.mxu0
    %v1277 = vmax.f32 %v1260, 0.0
    %v1278 = vmax.f32 %v1263, 0.0
    %v1279 = vmax.f32 %v1266, 0.0
    %v1280 = vmax.f32 %v1269, 0.0
    %v1281 = vmax.f32 %v1272, 0.0
    %v1282 = vmax.f32 %v1275, 0.0
    %vm1283 = vcmask 57344
    %1284 = vst.msk [vmem:[#allocation2] sm:$0x1] %vm1283, %v1277
    %1286 = vrot.lane.b32.xlu0 %v1277, 8
    %v1287 = vpop.permute.xlu0 %1286
    %vm1289 = vcmask 127044
    %1290 = vst.msk [vmem:[#allocation2 - $0x4] sm:$0x10] %vm1289, %v1287
    %1292 = vrot.lane.b32.xlu0 %v1278, 16
    %v1293 = vpop.permute.xlu0 %1292
    %vm1295 = vcmask 188544
    %1296 = vst.msk [vmem:[#allocation2] sm:$0x1] %vm1295, %v1293
    %1297 = vrot.lane.b32.xlu0 %v1278, 24
    %v1298 = vpop.permute.xlu0 %1297
    %vm1300 = vcmask 258244
    %1301 = vst.msk [vmem:[#allocation2 - $0x4] sm:$0x10] %vm1300, %v1298
    %1303 = vrot.lane.b32.xlu0 %v1279, 32
    %v1304 = vpop.permute.xlu0 %1303
    %vm1306 = vcmask 319744
    %1307 = vst.msk [vmem:[#allocation2] sm:$0x1] %vm1306, %v1304
    %1308 = vrot.lane.b32.xlu0 %v1279, 40
    %v1309 = vpop.permute.xlu0 %1308
    %vm1311 = vcmask 389444
    %1312 = vst.msk [vmem:[#allocation2 - $0x4] sm:$0x10] %vm1311, %v1309
    %1313 = vst.msk [vmem:[#allocation2 + $0x1] sm:$0x1] %vm1283, %v1280
    %1315 = vrot.lane.b32.xlu0 %v1280, 8
    %v1316 = vpop.permute.xlu0 %1315
    %1318 = vst.msk [vmem:[#allocation2 - $0x3] sm:$0x10] %vm1289, %v1316
    %1320 = vrot.lane.b32.xlu0 %v1281, 16
    %v1321 = vpop.permute.xlu0 %1320
    %1323 = vst.msk [vmem:[#allocation2 + $0x1] sm:$0x1] %vm1295, %v1321
    %1324 = vrot.lane.b32.xlu0 %v1281, 24
    %v1325 = vpop.permute.xlu0 %1324
    %1327 = vst.msk [vmem:[#allocation2 - $0x3] sm:$0x10] %vm1300, %v1325
    %1329 = vrot.lane.b32.xlu0 %v1282, 32
    %v1330 = vpop.permute.xlu0 %1329
    %1332 = vst.msk [vmem:[#allocation2 + $0x1] sm:$0x1] %vm1306, %v1330
    %1333 = vrot.lane.b32.xlu0 %v1282, 40
    %v1334 = vpop.permute.xlu0 %1333
    %1336 = vst.msk [vmem:[#allocation2 - $0x3] sm:$0x10] %vm1311, %v1334
    %v1337 = vld [vmem:[#allocation2] sm:$0x3]
    %v1338 = vld [vmem:[%s2 + $0x18] sm:$0xff]
    %v1339 = vld [vmem:[%s2 + $0x20] sm:$0xff]
    %v1340 = vld [vmem:[%s2 + $0x28] sm:$0xff]
    %v1341 = vld [vmem:[%s2 + $0x30] sm:$0xff]
    %v1342 = vld [vmem:[%s2 + $0x38] sm:$0xff]
    %v1343 = vld [vmem:[%s2 + $0x40] sm:$0xff]
    %v1344 = vld [vmem:[%s2 + $0x4b] sm:$0x1]
    %v1345 = vperm.slane %v1344, 0
    %vm1346 = vcmask 392192
    %v1348 = vsel %vm1346, %v1337, 0
    %1350 = vmatpush.msra.mxu0 0.0
    %1351 = vmatpush.msra.mxu0 0.0
    %1352 = vmatpush.msra.mxu0 0.0
    %1353 = vmatpush.msra.mxu0 0.0
    %1354 = vmatpush.msra.mxu0 0.0
    %1355 = vmatpush.msra.mxu0 0.0
    %1356 = vmatpush.msra.mxu0 0.0
    %1357 = vmatpush.msra.mxu0 0.0
    %1358 = vmatpush.msra.mxu0 0.0
    %1359 = vmatpush.msra.mxu0 0.0
    %1360 = vmatpush.msra.mxu0 %v1343
    %1361 = vmatpush.msra.mxu0 %v1342
    %1362 = vmatpush.msra.mxu0 %v1341
    %1363 = vmatpush.msra.mxu0 %v1340
    %1364 = vmatpush.msra.mxu0 %v1339
    %1365 = vmatpush.msra.mxu0 %v1338
    %1366 = vmatmul.f32.gmra.mxu0 %v1348
    %v1367 = vpop.f32.mrf.mxu0
    %v1368 = vadd.f32 %v1345, %v1367
    %1369 = vdwg.mxu0
    %vm1370 = vcmask 25600
    %v1371 = vsel %vm1370, %v1368, -inf
    %1372 = vmax.xlane.f32.xlu0 %v1371
    %v1373 = vpop.xlane.xlu0 %1372
    %v1374 = vsub.f32 %v1368, %v1373
    %v1375 = vmul.f32 %v1374, 1.442695
    %v1376 = vpow.pop %v1375
    %v1377 = vsel %vm1370, %v1376, 0.0
    %1378 = vadd.xlane.f32.xlu0 %v1377
    %v1379 = vpop.xlane.xlu0 %1378
    %v1380 = vrcp.pop %v1379
    %v1381 = vmul.f32 %v1379, %v1380
    %v1382 = vsub.f32 1.0, %v1381
    %v1383 = vmul.f32 %v1380, %v1382
    %v1384 = vadd.f32 %v1380, %v1383
    %vm1385 = vweird.f32 %v1379
    %vm1386 = vweird.f32 %v1380
    %vm1387 = vmor %vm1385, %vm1386
    %v1388 = vsel %vm1387, %v1380, %v1384
    %v1389 = vand.u32 2147483647, %v1379
    %vm1390 = vcmp.eq.f32.partialorder %v1389, 8.507059e+37
    %v1391 = vand.u32 %v1379, 2147483648
    %v1392 = vor.u32 1.1754944e-38, %v1391
    %v1393 = vsel %vm1390, %v1392, %v1388
    %v1394 = vmul.f32 %v1376, %v1393
    %1395 = vst.msk [vmem:[#allocation3] sm:$0x3] %vm1370, %v1394
    // Predicated region
    $region14: #{model_forward.1} parent=1 // pred_check
      _
    $region15: #{model_forward.1} parent=1 // pred_check_branch
      %1397 = sbr.rel (0) target = $region17
    $region16: #{model_forward.1} parent=1 // pred_region
      %1399 = vsyncadd [#allocation4], 0
      %s1401 = sshll.u32 [#allocation3], 4
      %s1402 = int_to_ptr.vmem [resolvable:$true] %s1401
      %s1403 = sshll.u32 %s3, 4
      %s1404 = int_to_ptr.hbm [resolvable:$true] %s1403
      %1406 = dma.vmem_to_hbm [thread:$0]  %s1402, 32, %s1404, [#allocation4]
    $region17: #{model_forward.1} parent=1 // pred_fallthru
      _
    // Predicated region
    $region18: #{model_forward.1} parent=1 // pred_check
      _
    $region19: #{model_forward.1} parent=1 // pred_check_branch
      %1408 = sbr.rel (0) target = $region21
    $region20: #{model_forward.1} parent=1 // pred_region
      %1410 = dma.done [#allocation4], 32
    $region21: #{model_forward.1} parent=1 // pred_fallthru
      _
    %1411 = vsyncpa [#allocation4], 1

</llo_original>
